<compile_context>
chip_gen: v5e
topology: v5e:2x2
jax: 0.10.0
libtpu: 0.0.40
codegen_flags: <defaults>
</compile_context>

<pallas_src>
import functools

import jax
import jax.numpy as jnp
from jax import lax
from jax.experimental import pallas as pl
from jax.experimental.pallas import tpu as pltpu

EPS = 1e-5


def _im2col(x, k_taps):
    """x: [C, L] -> [k_taps*C, L]; rows [k*C:(k+1)*C] hold x shifted along L by
    (k - k_taps//2), zero-padded at the edges (matches Conv1d padding=k//2)."""
    c, l = x.shape
    pad = k_taps // 2
    rows = []
    for k in range(k_taps):
        d = k - pad
        if d == 0:
            rows.append(x)
        elif d < 0:
            zeros = jnp.zeros((c, -d), x.dtype)
            rows.append(jnp.concatenate([zeros, x[:, :l + d]], axis=1))
        else:
            zeros = jnp.zeros((c, d), x.dtype)
            rows.append(jnp.concatenate([x[:, d:], zeros], axis=1))
    return jnp.concatenate(rows, axis=0)


# --------------------------------------------------------------------------- #
# Path A: fully fused single-call kernel (whole problem resident in VMEM).
# --------------------------------------------------------------------------- #
def _fused_single_kernel(x_ref, s_ref, wb_ref, wl_ref, g_ref, b_ref, out_ref,
                         *, k_taps, batch):
    l = x_ref.shape[2]
    # im2col per batch element, concatenated along the lane axis -> wider matmuls.
    xcol = jnp.concatenate([_im2col(x_ref[b], k_taps) for b in range(batch)],
                           axis=1)                                  # [K*Cin, B*L]
    y = jnp.dot(wb_ref[...], xcol,
                preferred_element_type=jnp.float32)                 # [Cout, B*L]

    # BatchNorm1d training-mode statistics over (batch, length) = lane axis here.
    n = jnp.float32(batch * l)
    mean = jnp.sum(y, axis=1, keepdims=True) / n                    # [Cout, 1]
    var = jnp.maximum(jnp.sum(y * y, axis=1, keepdims=True) / n - mean * mean, 0.0)
    inv = lax.rsqrt(var + EPS)
    scale = g_ref[...] * inv                                        # [Cout, 1]
    shift = b_ref[...] - mean * scale

    scol = jnp.concatenate([_im2col(s_ref[b], k_taps) for b in range(batch)],
                           axis=1)                                  # [K*Cout, B*L]
    sconv = jnp.dot(wl_ref[...], scol, preferred_element_type=jnp.float32)

    out = jnp.maximum(y * scale + shift + sconv, 0.0)               # [Cout, B*L]
    for b in range(batch):
        out_ref[b] = out[:, b * l:(b + 1) * l].astype(out_ref.dtype)


# --------------------------------------------------------------------------- #
# Path B: two-pass pipeline over a grid on B (large problems).
# --------------------------------------------------------------------------- #
def _bconv_stats_kernel(x_ref, wb_ref, ssum_ref, ssq_ref, *, k_taps):
    """Pass 1 (grid over B, 'arbitrary'): b_conv for one batch element, accumulate
    per-channel sum / sum-of-squares into grid-resident accumulator outputs."""
    @pl.when(pl.program_id(0) == 0)
    def _init():
        ssum_ref[...] = jnp.zeros_like(ssum_ref)
        ssq_ref[...] = jnp.zeros_like(ssq_ref)

    xcol = _im2col(x_ref[0], k_taps)                               # [K*Cin, L]
    y = jnp.dot(wb_ref[...], xcol,
                preferred_element_type=jnp.float32)                # [Cout, L]
    ssum_ref[...] += jnp.sum(y, axis=1, keepdims=True)             # [Cout, 1]
    ssq_ref[...] += jnp.sum(y * y, axis=1, keepdims=True)


def _fused_fwd_kernel(x_ref, s_ref, wb_ref, wl_ref, scale_ref, shift_ref,
                      out_ref, *, k_taps):
    """Pass 2 (grid over B, 'parallel'): recompute b_conv, apply folded BN
    scale/shift, add l_conv(state), ReLU. Output block is lane-dense [Cout, L]."""
    xcol = _im2col(x_ref[0], k_taps)
    y = jnp.dot(wb_ref[...], xcol, preferred_element_type=jnp.float32)
    scol = _im2col(s_ref[0], k_taps)
    sconv = jnp.dot(wl_ref[...], scol, preferred_element_type=jnp.float32)
    out = y * scale_ref[...] + shift_ref[...] + sconv              # folded BN + add
    out_ref[0] = jnp.maximum(out, 0.0).astype(out_ref.dtype)


def _single_call_fits(B, Cin, Cout, L, K):
    """Rough VMEM-footprint estimate (f32 words, x3 safety for temporaries)."""
    elems = (B * Cin * L + 2 * B * Cout * L            # x, state, out
             + K * Cin * B * L + K * Cout * B * L      # im2col buffers
             + 2 * Cout * B * L                        # y, sconv
             + Cout * (K * Cin + K * Cout + 4))        # weights + BN vectors
    return elems * 4 * 3 < 8 * 1024 * 1024


def blt_block_forward(inp, state, wb, wl, gamma, beta, *,
                      kernel_size=3, mxu_dtype=jnp.float32, force_two_pass=False):
    """inp: [B, C_in, L], state: [B, C_out, L] (PyTorch NCL layout, kept end-to-end).
    wb: [C_out, C_in, K], wl: [C_out, C_out, K], gamma/beta: [C_out].
    Returns (output, state), both [B, C_out, L] float32."""
    B, Cin, L = inp.shape
    Cout = wb.shape[0]
    K = kernel_size

    # Weight re-layout for the fused-tap contraction: [Cout, K*Cin], k-major rows,
    # matching the in-kernel im2col stacking.
    wb_flat = jnp.transpose(wb, (0, 2, 1)).reshape(Cout, K * Cin).astype(mxu_dtype)
    wl_flat = jnp.transpose(wl, (0, 2, 1)).reshape(Cout, K * Cout).astype(mxu_dtype)
    x = inp.astype(mxu_dtype)       # NCL, no transpose / pad
    s = state.astype(mxu_dtype)
    g2 = gamma.astype(jnp.float32).reshape(Cout, 1)
    b2 = beta.astype(jnp.float32).reshape(Cout, 1)

    if (not force_two_pass) and _single_call_fits(B, Cin, Cout, L, K):
        # ---- Path A: single fused pallas_call (no grid, whole batch in VMEM) ----
        vspec = pl.BlockSpec(memory_space=pltpu.MemorySpace.VMEM)
        out = pl.pallas_call(
            functools.partial(_fused_single_kernel, k_taps=K, batch=B),
            out_shape=jax.ShapeDtypeStruct((B, Cout, L), jnp.float32),
            in_specs=[vspec] * 6,
            out_specs=vspec,
            compiler_params=pltpu.CompilerParams(
                vmem_limit_bytes=64 * 1024 * 1024),
        )(x, s, wb_flat, wl_flat, g2, b2)
        return out, out

    # ---- Path B: two-pass pipeline (grid over B) ----
    cparams_serial = pltpu.CompilerParams(
        dimension_semantics=("arbitrary",),        # stats accumulate across B
        vmem_limit_bytes=32 * 1024 * 1024)
    cparams_parallel = pltpu.CompilerParams(
        dimension_semantics=("parallel",),         # shard B across TCs (v7x)
        vmem_limit_bytes=32 * 1024 * 1024)

    # Pass 1: b_conv + per-channel sum / sumsq (BatchNorm statistics).
    ssum, ssq = pl.pallas_call(
        functools.partial(_bconv_stats_kernel, k_taps=K),
        out_shape=(jax.ShapeDtypeStruct((Cout, 1), jnp.float32),
                   jax.ShapeDtypeStruct((Cout, 1), jnp.float32)),
        grid=(B,),
        in_specs=[pl.BlockSpec((1, Cin, L), lambda b: (b, 0, 0)),
                  pl.BlockSpec((Cout, K * Cin), lambda b: (0, 0))],
        out_specs=(pl.BlockSpec((Cout, 1), lambda b: (0, 0)),
                   pl.BlockSpec((Cout, 1), lambda b: (0, 0))),
        compiler_params=cparams_serial,
    )(x, wb_flat)

    # Fold BN (training-mode batch stats, biased variance) into scale/shift.
    n = jnp.float32(B * L)
    mean = ssum[:, 0] / n
    var = jnp.maximum(ssq[:, 0] / n - mean * mean, 0.0)
    inv = lax.rsqrt(var + EPS)
    g32 = gamma.astype(jnp.float32)
    scale = (g32 * inv).reshape(Cout, 1)
    shift = (beta.astype(jnp.float32) - mean * g32 * inv).reshape(Cout, 1)

    # Pass 2: fused b_conv + BN(scale/shift) + l_conv + add + ReLU.
    out = pl.pallas_call(
        functools.partial(_fused_fwd_kernel, k_taps=K),
        out_shape=jax.ShapeDtypeStruct((B, Cout, L), jnp.float32),
        grid=(B,),
        in_specs=[pl.BlockSpec((1, Cin, L), lambda b: (b, 0, 0)),
                  pl.BlockSpec((1, Cout, L), lambda b: (b, 0, 0)),
                  pl.BlockSpec((Cout, K * Cin), lambda b: (0, 0)),
                  pl.BlockSpec((Cout, K * Cout), lambda b: (0, 0)),
                  pl.BlockSpec((Cout, 1), lambda b: (0, 0)),
                  pl.BlockSpec((Cout, 1), lambda b: (0, 0))],
        out_specs=pl.BlockSpec((1, Cout, L), lambda b: (b, 0, 0)),
        compiler_params=cparams_parallel,
    )(x, s, wb_flat, wl_flat, scale, shift)

    # TODO(synk): for very large L, add an L-tile grid axis with a 1-element halo
    # (overlapping fetch or in-kernel halo DMA); unnecessary at these sizes.
    return out, out


def ref_forward(inp, state, wb, wl, gamma, beta):
    """Pure-JAX reference (independent conv implementation, two-pass BN stats)."""
    dn = ('NCH', 'OIH', 'NCH')
    y = lax.conv_general_dilated(inp, wb, window_strides=(1,),
                                 padding=((1, 1),), dimension_numbers=dn)
    mean = jnp.mean(y, axis=(0, 2), keepdims=True)
    var = jnp.mean((y - mean) ** 2, axis=(0, 2), keepdims=True)
    ynorm = (y - mean) / jnp.sqrt(var + EPS) * gamma.reshape(1, -1, 1) + beta.reshape(1, -1, 1)
    sc = lax.conv_general_dilated(state, wl, window_strides=(1,),
                                  padding=((1, 1),), dimension_numbers=dn)
    return jnp.maximum(ynorm + sc, 0.0)


if __name__ == "__main__":
    B, C_IN, C_OUT, L, K = 2, 4, 8, 16, 3

    key = jax.random.PRNGKey(0)
    k1, k2, k3, k4 = jax.random.split(key, 4)

    # Deterministic parameter init (shapes match nn.Conv1d / nn.BatchNorm1d).
    wb = jax.random.normal(k1, (C_OUT, C_IN, K), jnp.float32) * 0.2   # b_conv.weight
    wl = jax.random.normal(k2, (C_OUT, C_OUT, K), jnp.float32) * 0.2  # l_conv.weight
    gamma = jnp.ones((C_OUT,), jnp.float32)                           # norm.weight
    beta = jnp.zeros((C_OUT,), jnp.float32)                           # norm.bias

    inp = jax.random.normal(k3, (B, C_IN, L), jnp.float32)
    state = jax.random.normal(k4, (B, C_OUT, L), jnp.float32)

    ref = ref_forward(inp, state, wb, wl, gamma, beta)

    # Path A: single fused call, f32 MXU (bit-accurate check against reference).
    fwd = jax.jit(functools.partial(blt_block_forward, kernel_size=K))
    out, new_state = fwd(inp, state, wb, wl, gamma, beta)
    out = jax.block_until_ready(out)
    assert out.shape == (B, C_OUT, L)
    assert jnp.allclose(out, ref, atol=1e-4, rtol=1e-4), "fused path mismatch"
    assert jnp.allclose(new_state, out), "state must equal output"

    # Path B: two-pass pipeline (used for large problems) — verify it too.
    fwd_2p = jax.jit(functools.partial(blt_block_forward, kernel_size=K,
                                       force_two_pass=True))
    out_2p, _ = fwd_2p(inp, state, wb, wl, gamma, beta)
    out_2p = jax.block_until_ready(out_2p)
    assert jnp.allclose(out_2p, ref, atol=1e-4, rtol=1e-4), "two-pass path mismatch"

    # bf16 MXU-operand path (recommended on v6e/v7x); elementwise/BN math stays f32.
    fwd_bf16 = jax.jit(functools.partial(blt_block_forward, kernel_size=K,
                                         mxu_dtype=jnp.bfloat16))
    out_bf16, _ = fwd_bf16(inp, state, wb, wl, gamma, beta)
    out_bf16 = jax.block_until_ready(out_bf16)
    assert jnp.allclose(out_bf16, ref, atol=1e-1, rtol=1e-1), "bf16 path diverged"

    # TODO(synk): 'gate'/'mod'/'sub'/'div' operations, feedback/t_conv + nearest
    # interpolation, downsample/skip inputs, and the BatchNorm running-stat update
    # side effect are not exercised by this config (operation='add', others None).
    print("KERNEL_OK")
</pallas_src>

<mosaic_0001>
module attributes {stable_mosaic.version = 11 : i64} {
  func.func @_fused_single_kernel(%arg0: memref<2x4x16xf32, #tpu.memory_space<vmem>>, %arg1: memref<2x8x16xf32, #tpu.memory_space<vmem>>, %arg2: memref<8x12xf32, #tpu.memory_space<vmem>>, %arg3: memref<8x24xf32, #tpu.memory_space<vmem>>, %arg4: memref<8x1xf32, #tpu.memory_space<vmem>>, %arg5: memref<8x1xf32, #tpu.memory_space<vmem>>, %arg6: memref<2x8x16xf32, #tpu.memory_space<vmem>>) attributes {dimension_semantics = [], scalar_prefetch = 0 : i64, scratch_operands = 0 : i64, tpu.core_type = #tpu.core_type<tc>} {
    %c0 = arith.constant 0 : index
    %c0_0 = arith.constant 0 : index
    %c0_1 = arith.constant 0 : index
    %0 = vector.load %arg0[%c0, %c0_0, %c0_1] : memref<2x4x16xf32, #tpu.memory_space<vmem>>, vector<1x4x16xf32>
    %1 = vector.shape_cast %0 : vector<1x4x16xf32> to vector<4x16xf32>
    %cst = arith.constant 0.000000e+00 : f32
    %2 = vector.broadcast %cst : f32 to vector<4x1xf32>
    %3 = vector.extract_strided_slice %1 {offsets = [0, 0], sizes = [4, 15], strides = [1, 1]} : vector<4x16xf32> to vector<4x15xf32>
    %4 = tpu.concatenate %2, %3 in 1 : vector<4x1xf32>, vector<4x15xf32> -> vector<4x16xf32>
    %cst_2 = arith.constant 0.000000e+00 : f32
    %5 = vector.broadcast %cst_2 : f32 to vector<4x1xf32>
    %6 = vector.extract_strided_slice %1 {offsets = [0, 1], sizes = [4, 15], strides = [1, 1]} : vector<4x16xf32> to vector<4x15xf32>
    %7 = tpu.concatenate %6, %5 in 1 : vector<4x15xf32>, vector<4x1xf32> -> vector<4x16xf32>
    %8 = tpu.concatenate %4, %1, %7 in 0 : vector<4x16xf32>, vector<4x16xf32>, vector<4x16xf32> -> vector<12x16xf32>
    %c1 = arith.constant 1 : index
    %c0_3 = arith.constant 0 : index
    %c0_4 = arith.constant 0 : index
    %9 = vector.load %arg0[%c1, %c0_3, %c0_4] : memref<2x4x16xf32, #tpu.memory_space<vmem>>, vector<1x4x16xf32>
    %10 = vector.shape_cast %9 : vector<1x4x16xf32> to vector<4x16xf32>
    %cst_5 = arith.constant 0.000000e+00 : f32
    %11 = vector.broadcast %cst_5 : f32 to vector<4x1xf32>
    %12 = vector.extract_strided_slice %10 {offsets = [0, 0], sizes = [4, 15], strides = [1, 1]} : vector<4x16xf32> to vector<4x15xf32>
    %13 = tpu.concatenate %11, %12 in 1 : vector<4x1xf32>, vector<4x15xf32> -> vector<4x16xf32>
    %cst_6 = arith.constant 0.000000e+00 : f32
    %14 = vector.broadcast %cst_6 : f32 to vector<4x1xf32>
    %15 = vector.extract_strided_slice %10 {offsets = [0, 1], sizes = [4, 15], strides = [1, 1]} : vector<4x16xf32> to vector<4x15xf32>
    %16 = tpu.concatenate %15, %14 in 1 : vector<4x15xf32>, vector<4x1xf32> -> vector<4x16xf32>
    %17 = tpu.concatenate %13, %10, %16 in 0 : vector<4x16xf32>, vector<4x16xf32>, vector<4x16xf32> -> vector<12x16xf32>
    %18 = tpu.concatenate %8, %17 in 1 : vector<12x16xf32>, vector<12x16xf32> -> vector<12x32xf32>
    %c0_7 = arith.constant 0 : index
    %c0_8 = arith.constant 0 : index
    %19 = vector.load %arg2[%c0_7, %c0_8] : memref<8x12xf32, #tpu.memory_space<vmem>>, vector<8x12xf32>
    %cst_9 = arith.constant dense<0.000000e+00> : vector<8x32xf32>
    %20 = tpu.matmul %19, %18, %cst_9 {dimension_numbers = #tpu.dot_dimension_numbers<[1], [0], [0], [1], [0, 0, 1, 1], [], []>} : vector<8x12xf32>, vector<12x32xf32>, vector<8x32xf32> -> vector<8x32xf32>
    %cst_10 = arith.constant dense<0.000000e+00> : vector<8xf32>
    %21 = vector.multi_reduction <add>, %20, %cst_10 [1] : vector<8x32xf32> to vector<8xf32>
    %22 = vector.shape_cast %21 : vector<8xf32> to vector<8x1xf32>
    %cst_11 = arith.constant 3.200000e+01 : f32
    %23 = vector.broadcast %cst_11 : f32 to vector<8x1xf32>
    %24 = arith.divf %22, %23 : vector<8x1xf32>
    %25 = arith.mulf %20, %20 : vector<8x32xf32>
    %cst_12 = arith.constant dense<0.000000e+00> : vector<8xf32>
    %26 = vector.multi_reduction <add>, %25, %cst_12 [1] : vector<8x32xf32> to vector<8xf32>
    %27 = vector.shape_cast %26 : vector<8xf32> to vector<8x1xf32>
    %cst_13 = arith.constant 3.200000e+01 : f32
    %28 = vector.broadcast %cst_13 : f32 to vector<8x1xf32>
    %29 = arith.divf %27, %28 : vector<8x1xf32>
    %30 = arith.mulf %24, %24 : vector<8x1xf32>
    %31 = arith.subf %29, %30 : vector<8x1xf32>
    %cst_14 = arith.constant 0.000000e+00 : f32
    %32 = vector.broadcast %cst_14 : f32 to vector<8x1xf32>
    %33 = arith.maximumf %31, %32 : vector<8x1xf32>
    %cst_15 = arith.constant 9.99999974E-6 : f32
    %34 = vector.broadcast %cst_15 : f32 to vector<8x1xf32>
    %35 = arith.addf %33, %34 : vector<8x1xf32>
    %36 = math.rsqrt %35 : vector<8x1xf32>
    %c0_16 = arith.constant 0 : index
    %c0_17 = arith.constant 0 : index
    %37 = vector.load %arg4[%c0_16, %c0_17] : memref<8x1xf32, #tpu.memory_space<vmem>>, vector<8x1xf32>
    %38 = arith.mulf %37, %36 : vector<8x1xf32>
    %c0_18 = arith.constant 0 : index
    %c0_19 = arith.constant 0 : index
    %39 = vector.load %arg5[%c0_18, %c0_19] : memref<8x1xf32, #tpu.memory_space<vmem>>, vector<8x1xf32>
    %40 = arith.mulf %24, %38 : vector<8x1xf32>
    %41 = arith.subf %39, %40 : vector<8x1xf32>
    %c0_20 = arith.constant 0 : index
    %c0_21 = arith.constant 0 : index
    %c0_22 = arith.constant 0 : index
    %42 = vector.load %arg1[%c0_20, %c0_21, %c0_22] : memref<2x8x16xf32, #tpu.memory_space<vmem>>, vector<1x8x16xf32>
    %43 = vector.shape_cast %42 : vector<1x8x16xf32> to vector<8x16xf32>
    %cst_23 = arith.constant 0.000000e+00 : f32
    %44 = vector.broadcast %cst_23 : f32 to vector<8x1xf32>
    %45 = vector.extract_strided_slice %43 {offsets = [0, 0], sizes = [8, 15], strides = [1, 1]} : vector<8x16xf32> to vector<8x15xf32>
    %46 = tpu.concatenate %44, %45 in 1 : vector<8x1xf32>, vector<8x15xf32> -> vector<8x16xf32>
    %cst_24 = arith.constant 0.000000e+00 : f32
    %47 = vector.broadcast %cst_24 : f32 to vector<8x1xf32>
    %48 = vector.extract_strided_slice %43 {offsets = [0, 1], sizes = [8, 15], strides = [1, 1]} : vector<8x16xf32> to vector<8x15xf32>
    %49 = tpu.concatenate %48, %47 in 1 : vector<8x15xf32>, vector<8x1xf32> -> vector<8x16xf32>
    %50 = tpu.concatenate %46, %43, %49 in 0 : vector<8x16xf32>, vector<8x16xf32>, vector<8x16xf32> -> vector<24x16xf32>
    %c1_25 = arith.constant 1 : index
    %c0_26 = arith.constant 0 : index
    %c0_27 = arith.constant 0 : index
    %51 = vector.load %arg1[%c1_25, %c0_26, %c0_27] : memref<2x8x16xf32, #tpu.memory_space<vmem>>, vector<1x8x16xf32>
    %52 = vector.shape_cast %51 : vector<1x8x16xf32> to vector<8x16xf32>
    %cst_28 = arith.constant 0.000000e+00 : f32
    %53 = vector.broadcast %cst_28 : f32 to vector<8x1xf32>
    %54 = vector.extract_strided_slice %52 {offsets = [0, 0], sizes = [8, 15], strides = [1, 1]} : vector<8x16xf32> to vector<8x15xf32>
    %55 = tpu.concatenate %53, %54 in 1 : vector<8x1xf32>, vector<8x15xf32> -> vector<8x16xf32>
    %cst_29 = arith.constant 0.000000e+00 : f32
    %56 = vector.broadcast %cst_29 : f32 to vector<8x1xf32>
    %57 = vector.extract_strided_slice %52 {offsets = [0, 1], sizes = [8, 15], strides = [1, 1]} : vector<8x16xf32> to vector<8x15xf32>
    %58 = tpu.concatenate %57, %56 in 1 : vector<8x15xf32>, vector<8x1xf32> -> vector<8x16xf32>
    %59 = tpu.concatenate %55, %52, %58 in 0 : vector<8x16xf32>, vector<8x16xf32>, vector<8x16xf32> -> vector<24x16xf32>
    %60 = tpu.concatenate %50, %59 in 1 : vector<24x16xf32>, vector<24x16xf32> -> vector<24x32xf32>
    %c0_30 = arith.constant 0 : index
    %c0_31 = arith.constant 0 : index
    %61 = vector.load %arg3[%c0_30, %c0_31] : memref<8x24xf32, #tpu.memory_space<vmem>>, vector<8x24xf32>
    %cst_32 = arith.constant dense<0.000000e+00> : vector<8x32xf32>
    %62 = tpu.matmul %61, %60, %cst_32 {dimension_numbers = #tpu.dot_dimension_numbers<[1], [0], [0], [1], [0, 0, 1, 1], [], []>} : vector<8x24xf32>, vector<24x32xf32>, vector<8x32xf32> -> vector<8x32xf32>
    %63 = vector.broadcast %38 : vector<8x1xf32> to vector<8x32xf32>
    %64 = arith.mulf %20, %63 : vector<8x32xf32>
    %65 = vector.broadcast %41 : vector<8x1xf32> to vector<8x32xf32>
    %66 = arith.addf %64, %65 : vector<8x32xf32>
    %67 = arith.addf %66, %62 : vector<8x32xf32>
    %cst_33 = arith.constant 0.000000e+00 : f32
    %68 = vector.broadcast %cst_33 : f32 to vector<8x32xf32>
    %69 = arith.maximumf %67, %68 : vector<8x32xf32>
    %70 = vector.extract_strided_slice %69 {offsets = [0, 0], sizes = [8, 16], strides = [1, 1]} : vector<8x32xf32> to vector<8x16xf32>
    %c0_34 = arith.constant 0 : index
    %c0_35 = arith.constant 0 : index
    %c0_36 = arith.constant 0 : index
    %71 = vector.load %arg6[%c0_34, %c0_35, %c0_36] : memref<2x8x16xf32, #tpu.memory_space<vmem>>, vector<1x8x16xf32>
    %72 = vector.shape_cast %71 : vector<1x8x16xf32> to vector<8x16xf32>
    %73 = vector.shape_cast %70 : vector<8x16xf32> to vector<1x8x16xf32>
    tpu.vector_store %arg6[%c0_34, %c0_35, %c0_36], %73 {strides = array<i32>} : memref<2x8x16xf32, #tpu.memory_space<vmem>>, vector<1x8x16xf32>,
    %74 = vector.extract_strided_slice %69 {offsets = [0, 16], sizes = [8, 16], strides = [1, 1]} : vector<8x32xf32> to vector<8x16xf32>
    %c1_37 = arith.constant 1 : index
    %c0_38 = arith.constant 0 : index
    %c0_39 = arith.constant 0 : index
    %75 = vector.load %arg6[%c1_37, %c0_38, %c0_39] : memref<2x8x16xf32, #tpu.memory_space<vmem>>, vector<1x8x16xf32>
    %76 = vector.shape_cast %75 : vector<1x8x16xf32> to vector<8x16xf32>
    %77 = vector.shape_cast %74 : vector<8x16xf32> to vector<1x8x16xf32>
    tpu.vector_store %arg6[%c1_37, %c0_38, %c0_39], %77 {strides = array<i32>} : memref<2x8x16xf32, #tpu.memory_space<vmem>>, vector<1x8x16xf32>,
    return
  }
}

</mosaic_0001>

<llo_original>
// kernel: blt_block_forward.1
$region0: #{blt_block_forward.1}
  #allocation0 [shape = 'u32[]', space=smem, size = 0x4, offset = 0x4, fixed_abs, tag = 'smem constant byte address 0x4 - core index']
  #allocation1 [shape = 'u32[72,128]{1,0:T(1,128)}', space=vmem, size = 0x9000, scoped, tag = 'internal scratch']
  %s0 = inlined_call_operand.vmem [shape: f32[2,4,16], index: 0, kind: input, shape index: {}]
  %s1 = inlined_call_operand.vmem [shape: f32[2,8,16], index: 1, kind: input, shape index: {}]
  %s2 = inlined_call_operand.vmem [shape: f32[8,12], index: 2, kind: input, shape index: {}]
  %s3 = inlined_call_operand.vmem [shape: f32[8,24], index: 3, kind: input, shape index: {}]
  %s4 = inlined_call_operand.vmem [shape: f32[8,1], index: 4, kind: input, shape index: {}]
  %s5 = inlined_call_operand.vmem [shape: f32[8,1], index: 5, kind: input, shape index: {}]
  %s6 = inlined_call_operand.vmem [shape: f32[2,8,16], index: 6, kind: output, shape index: {}]
  %s7 = sld [smem:[#allocation0]]
  $region34: #{blt_block_forward.1} parent=0
    _
  %s9 = ssub.s32 1, %s7
  %s10 = scalar_select 0, %s9, %s7
  // Predicated region
  $region2: #{blt_block_forward.1} parent=0 // pred_check
    _
  $region3: #{blt_block_forward.1} parent=0 // pred_check_branch
    %12 = sbr.rel (0) target = $region5
  $region4: #{blt_block_forward.1} parent=0 // pred_region
    _
  $region5: #{blt_block_forward.1} parent=0 // pred_fallthru
    _
  // Predicated region
  $region6: #{blt_block_forward.1} parent=0 // pred_check
    _
  $region7: #{blt_block_forward.1} parent=0 // pred_check_branch
    %14 = sbr.rel (0) target = $region9
  $region8: #{blt_block_forward.1} parent=0 // pred_region
    _
  $region9: #{blt_block_forward.1} parent=0 // pred_fallthru
    _
  // Predicated region
  $region10: #{blt_block_forward.1} parent=0 // pred_check
    _
  $region11: #{blt_block_forward.1} parent=0 // pred_check_branch
    %16 = sbr.rel (0) target = $region13
  $region12: #{blt_block_forward.1} parent=0 // pred_region
    _
  $region13: #{blt_block_forward.1} parent=0 // pred_fallthru
    _
  // Predicated region
  $region14: #{blt_block_forward.1} parent=0 // pred_check
    _
  $region15: #{blt_block_forward.1} parent=0 // pred_check_branch
    %18 = sbr.rel (0) target = $region17
  $region16: #{blt_block_forward.1} parent=0 // pred_region
    _
  $region17: #{blt_block_forward.1} parent=0 // pred_fallthru
    _
  // Predicated region
  $region18: #{blt_block_forward.1} parent=0 // pred_check
    _
  $region19: #{blt_block_forward.1} parent=0 // pred_check_branch
    %20 = sbr.rel (0) target = $region21
  $region20: #{blt_block_forward.1} parent=0 // pred_region
    _
  $region21: #{blt_block_forward.1} parent=0 // pred_fallthru
    _
  // Predicated region
  $region22: #{blt_block_forward.1} parent=0 // pred_check
    _
  $region23: #{blt_block_forward.1} parent=0 // pred_check_branch
    %22 = sbr.rel (0) target = $region25
  $region24: #{blt_block_forward.1} parent=0 // pred_region
    _
  $region25: #{blt_block_forward.1} parent=0 // pred_fallthru
    _
  %v23 = vld [vmem:[%s0] sm:$0xf]
  %25 = vrot.lane.b32.xlu0 %v23, 1
  %v26 = vpop.permute.xlu0 %25
  %vm28 = vcmask 7168
  %v29 = vsel %vm28, 0.0, %v26
  %30 = vrot.lane.b32.xlu0 %v23, 127
  %v31 = vpop.permute.xlu0 %30
  %vm33 = vcmask 121856
  %v34 = vsel %vm33, %v31, 0.0
  %v35 = vrot.slane %v23, 4
  %vm37 = vcmask 1043456
  %v38 = vsel %vm37, %v29, %v35
  %s39 = scalar_lea.vmem %s0, 4
  %v40 = vld [vmem:[%s39] sm:$0xf]
  %42 = vrot.lane.b32.xlu0 %v40, 1
  %v43 = vpop.permute.xlu0 %42
  %v45 = vsel %vm28, 0.0, %v43
  %46 = vrot.lane.b32.xlu0 %v40, 127
  %v47 = vpop.permute.xlu0 %46
  %v49 = vsel %vm33, %v47, 0.0
  %v50 = vrot.slane %v40, 4
  %v52 = vsel %vm37, %v45, %v50
  %55 = vrot.lane.b32.xlu0 %v52, 16
  %v56 = vpop.permute.xlu0 %55
  %57 = vrot.lane.b32.xlu0 %v49, 16
  %v58 = vpop.permute.xlu0 %57
  %vm61 = vcmask 130048
  %v62 = vsel %vm61, %v38, %v56
  %v63 = vsel %vm61, %v34, %v58
  %v64 = vld [vmem:[%s2] sm:$0xff]
  %vm65 = vcmask 97280
  %v67 = vsel %vm65, %v64, 0
  %v70 = vsel %vm37, %v63, 0
  %72 = vmatpush.msra.mxu0 0.0
  %73 = vmatpush.msra.mxu0 0.0
  %74 = vmatpush.msra.mxu0 0.0
  %75 = vmatpush.msra.mxu0 0.0
  %76 = vmatpush.msra.mxu0 0.0
  %77 = vmatpush.msra.mxu0 0.0
  %78 = vmatpush.msra.mxu0 0.0
  %79 = vmatpush.msra.mxu0 0.0
  %80 = vmatpush.msra.mxu0 0.0
  %81 = vmatpush.msra.mxu0 0.0
  %82 = vmatpush.msra.mxu0 0.0
  %83 = vmatpush.msra.mxu0 0.0
  %84 = vmatpush.msra.mxu0 0.0
  %85 = vmatpush.msra.mxu0 0.0
  %86 = vmatpush.msra.mxu0 %v70
  %87 = vmatpush.msra.mxu0 %v62
  %88 = vmatmul.f32.gmra.mxu0 %v67
  %v89 = vpop.f32.mrf.mxu0
  %v90 = vadd.f32 0.0, %v89
  %91 = vdwg.mxu0
  %vm92 = vcmask 261120
  %v93 = vsel %vm92, %v90, 0.0
  %94 = vadd.xlane.f32.xlu0 %v93
  %v95 = vpop.xlane.xlu0 %94
  %v96 = vrcp.pop 32.0
  %v97 = vmul.f32 32.0, %v96
  %v98 = vsub.f32 1.0, %v97
  %v99 = vmul.f32 %v96, %v98
  %v100 = vadd.f32 %v96, %v99
  %vm101 = vweird.f32 %v96
  %v102 = vsel %vm101, %v96, %v100
  %v103 = vmul.f32 %v95, %v102
  %v104 = vmul.f32 %v90, %v90
  %v105 = vsel %vm92, %v104, 0.0
  %106 = vadd.xlane.f32.xlu0 %v105
  %v107 = vpop.xlane.xlu0 %106
  %v108 = vmul.f32 %v107, %v102
  %v109 = vmul.f32 %v103, %v103
  %v110 = vsub.f32 %v108, %v109
  %v111 = vmax.f32 %v110, 0.0
  %v112 = vadd.f32 %v111, 1e-05
  %v113 = vrsqrt.pop %v112
  %v114 = vmul.f32 %v113, %v112
  %v115 = vmul.f32 %v114, %v113
  %v116 = vmul.f32 0.5, %v115
  %v117 = vsub.f32 1.5, %v116
  %v118 = vmul.f32 %v113, %v117
  %vm119 = vweird.f32 %v112
  %vm120 = vweird.f32 %v113
  %vm121 = vmor %vm119, %vm120
  %v122 = vsel %vm121, %v113, %v118
  %v123 = vld [vmem:[%s4] sm:$0xff]
  %v124 = vmul.f32 %v123, %v122
  %v125 = vld [vmem:[%s5] sm:$0xff]
  %v126 = vmul.f32 %v103, %v124
  %v127 = vsub.f32 %v125, %v126
  %v128 = vld [vmem:[%s1] sm:$0xff]
  %130 = vrot.lane.b32.xlu0 %v128, 1
  %v131 = vpop.permute.xlu0 %130
  %v133 = vsel %vm28, 0.0, %v131
  %134 = vrot.lane.b32.xlu0 %v128, 127
  %v135 = vpop.permute.xlu0 %134
  %v137 = vsel %vm33, %v135, 0.0
  %s138 = scalar_lea.vmem %s1, 8
  %v139 = vld [vmem:[%s138] sm:$0xff]
  %141 = vrot.lane.b32.xlu0 %v139, 1
  %v142 = vpop.permute.xlu0 %141
  %v144 = vsel %vm28, 0.0, %v142
  %145 = vrot.lane.b32.xlu0 %v139, 127
  %v146 = vpop.permute.xlu0 %145
  %v148 = vsel %vm33, %v146, 0.0
  %151 = vrot.lane.b32.xlu0 %v144, 16
  %v152 = vpop.permute.xlu0 %151
  %153 = vrot.lane.b32.xlu0 %v139, 16
  %v154 = vpop.permute.xlu0 %153
  %155 = vrot.lane.b32.xlu0 %v148, 16
  %v156 = vpop.permute.xlu0 %155
  %v160 = vsel %vm61, %v133, %v152
  %v161 = vsel %vm61, %v128, %v154
  %v162 = vsel %vm61, %v137, %v156
  %v163 = vld [vmem:[%s3] sm:$0xff]
  %vm164 = vcmask 195584
  %v166 = vsel %vm164, %v163, 0
  %168 = vmatpush.msra.mxu0 0.0
  %169 = vmatpush.msra.mxu0 0.0
  %170 = vmatpush.msra.mxu0 0.0
  %171 = vmatpush.msra.mxu0 0.0
  %172 = vmatpush.msra.mxu0 0.0
  %173 = vmatpush.msra.mxu0 0.0
  %174 = vmatpush.msra.mxu0 0.0
  %175 = vmatpush.msra.mxu0 0.0
  %176 = vmatpush.msra.mxu0 0.0
  %177 = vmatpush.msra.mxu0 0.0
  %178 = vmatpush.msra.mxu0 0.0
  %179 = vmatpush.msra.mxu0 0.0
  %180 = vmatpush.msra.mxu0 0.0
  %181 = vmatpush.msra.mxu0 %v162
  %182 = vmatpush.msra.mxu0 %v161
  %183 = vmatpush.msra.mxu0 %v160
  %184 = vmatmul.f32.gmra.mxu0 %v166
  %v185 = vpop.f32.mrf.mxu0
  %v186 = vadd.f32 0.0, %v185
  %187 = vdwg.mxu0
  %189 = vset.pattern.permute.xlu0 0
  %190 = vperm.xlu0 %189, %v124
  %v191 = vpop.permute.xlu0 %190
  %v193 = vmul.f32 %v90, %v191
  %195 = vset.pattern.permute.xlu0 0
  %196 = vperm.xlu0 %195, %v127
  %v197 = vpop.permute.xlu0 %196
  %v199 = vadd.f32 %v193, %v197
  %v200 = vadd.f32 %v199, %v186
  %v201 = vmax.f32 %v200, 0.0
  %202 = vst.msk [vmem:[%s6] sm:$0xff] %vm61, %v201
  %204 = vrot.lane.b32.xlu0 %v201, 112
  %v205 = vpop.permute.xlu0 %204
  %s207 = scalar_lea.vmem %s6, 8
  %208 = vst.msk [vmem:[%s207] sm:$0xff] %vm61, %v205
  // Predicated region
  $region26: #{blt_block_forward.1} parent=0 // pred_check
    _
  $region27: #{blt_block_forward.1} parent=0 // pred_check_branch
    %210 = sbr.rel (0) target = $region29
  $region28: #{blt_block_forward.1} parent=0 // pred_region
    _
  $region29: #{blt_block_forward.1} parent=0 // pred_fallthru
    _
  // Predicated region
  $region30: #{blt_block_forward.1} parent=0 // pred_check
    _
  $region31: #{blt_block_forward.1} parent=0 // pred_check_branch
    %212 = sbr.rel (0) target = $region33
  $region32: #{blt_block_forward.1} parent=0 // pred_region
    _
  $region33: #{blt_block_forward.1} parent=0 // pred_fallthru
    _

</llo_original>
